<compile_context>
chip_gen: v6e
topology: v6e:2x2x1
jax: 0.10.0
libtpu: 0.0.40
codegen_flags: <defaults>
</compile_context>

<pallas_src>
import math
from functools import partial

import jax
import jax.numpy as jnp
import numpy as np
from jax import lax
from jax.experimental import pallas as pl
from jax.experimental.pallas import tpu as pltpu

SHIFT = 0
REDUCE = 1
NOOP = -1


# ---------------------------------------------------------------------------
# Kernel 1: buffer projection
#   c = x @ Wx + bx ; h = sigmoid(x @ Wg + bg) * tanh(c)
#   Fused weight [E, 2H] -> single matmul; output row layout is [h || c].
# ---------------------------------------------------------------------------
def _buffers_kernel(x_ref, w_ref, b_ref, hc_ref):
    proj = jnp.dot(x_ref[...], w_ref[...], preferred_element_type=jnp.float32)
    proj = proj + b_ref[...]
    H = proj.shape[-1] // 2
    c = proj[:, :H]
    h = jax.nn.sigmoid(proj[:, H:]) * jnp.tanh(c)
    hc_ref[...] = jnp.concatenate([h, c], axis=-1)       # [h || c], lane-dense


@jax.jit
def buffers_forward(x2d, w_proj, b_proj):
    rows, E = x2d.shape
    H2 = w_proj.shape[1]                       # 2H
    tm = rows if rows <= 1024 else 1024        # large row tile; weights load once
    # NOTE: the last partial tile computes on padded garbage rows; this is safe
    # because there is no cross-row reduction and out-of-range rows are dropped.
    return pl.pallas_call(
        _buffers_kernel,
        grid=(pl.cdiv(rows, tm),),
        in_specs=[
            pl.BlockSpec((tm, E), lambda i: (i, 0)),
            pl.BlockSpec((E, H2), lambda i: (0, 0)),
            pl.BlockSpec((1, H2), lambda i: (0, 0)),
        ],
        out_specs=pl.BlockSpec((tm, H2), lambda i: (i, 0)),
        out_shape=jax.ShapeDtypeStruct((rows, H2), jnp.float32),
        compiler_params=pltpu.CompilerParams(
            dimension_semantics=("parallel",)),
    )(x2d, w_proj, b_proj)


# ---------------------------------------------------------------------------
# Kernel 2: fused shift/reduce tree evaluation.
#   grid = (num_chunks,)  ("parallel" -> split across TCs on v7x);
#   the 2T-1 steps run inside a lax.fori_loop.
# ---------------------------------------------------------------------------
def _tree_kernel(B, Bc, T, H,
                 op_ref, src_ref, lpos_ref, rpos_ref, dst_ref, anyred_ref,  # SMEM
                 hcbuf_ref, wl_ref, wr_ref, br_ref,                         # VMEM in
                 out_ref,                                                   # VMEM out
                 stack, chl, chr, new_hc):                                  # scratch
    chunk = pl.program_id(0)
    b0 = chunk * Bc                     # first global batch index of this chunk
    n_steps = anyred_ref.shape[0]       # S = 2T-1 (static)
    stride = T + 1                      # per-batch stack stride; row T = dump slot

    # Zero-init scratch so SHIFT / no-op batches never feed uninitialized VMEM
    # into the matmuls (their results are masked out, but keep values finite).
    stack[...] = jnp.zeros_like(stack)
    chl[...] = jnp.zeros_like(chl)
    chr[...] = jnp.zeros_like(chr)
    new_hc[...] = jnp.zeros_like(new_hc)

    def step(t, carry):
        # ---- gather children (only for batches that REDUCE this step) ------
        for b in range(Bc):
            idx = t * B + b0 + b

            @pl.when(op_ref[idx] == REDUCE)
            def _gather(b=b, idx=idx):
                lrow = b * stride + lpos_ref[idx]
                rrow = b * stride + rpos_ref[idx]
                chl[pl.ds(b, 1), :] = stack[pl.ds(lrow, 1), :]
                chr[pl.ds(b, 1), :] = stack[pl.ds(rrow, 1), :]

        # ---- TreeLSTM reduce cell (skipped entirely on shift-only steps) ---
        @pl.when(anyred_ref[t] != 0)
        def _cell():
            l = chl[...]
            r = chr[...]
            h_l, c_l = l[:, :H], l[:, H:]
            h_r, c_r = r[:, :H], r[:, H:]
            proj = (jnp.dot(h_l, wl_ref[...], preferred_element_type=jnp.float32)
                    + jnp.dot(h_r, wr_ref[...], preferred_element_type=jnp.float32)
                    + br_ref[...])
            i_g = jax.nn.sigmoid(proj[:, 0 * H:1 * H])
            f_l = jax.nn.sigmoid(proj[:, 1 * H:2 * H])
            f_r = jax.nn.sigmoid(proj[:, 2 * H:3 * H])
            g_g = jnp.tanh(proj[:, 3 * H:4 * H])
            o_g = jax.nn.sigmoid(proj[:, 4 * H:5 * H])
            c_n = f_l * c_l + f_r * c_r + i_g * g_g
            h_n = o_g * jnp.tanh(c_n)
            new_hc[...] = jnp.concatenate([h_n, c_n], axis=-1)

        # ---- scatter: ONE unconditional store per batch ---------------------
        # SHIFT -> push buffer row `src`; REDUCE -> push the cell output;
        # no-op -> host points dst at the per-batch dump row (pos == T).
        for b in range(Bc):
            idx = t * B + b0 + b
            dst_row = b * stride + dst_ref[idx]
            src_row = b * T + src_ref[idx]
            shift_row = hcbuf_ref[pl.ds(src_row, 1), :]
            reduce_row = new_hc[pl.ds(b, 1), :]
            is_shift = (op_ref[idx] == SHIFT).astype(jnp.float32)
            stack[pl.ds(dst_row, 1), :] = (
                is_shift * shift_row + (1.0 - is_shift) * reduce_row)
        return carry

    lax.fori_loop(0, n_steps, step, 0)

    # ---- final output: root h sits in stack slot 0 of each batch -----------
    for b in range(Bc):
        out_ref[pl.ds(b, 1), :] = stack[pl.ds(b * stride, 1), :H]


@partial(jax.jit, static_argnums=(0, 1, 2))
def _tree_forward_impl(B, num_chunks, T, op, src, lpos, rpos, dst, anyred,
                       hcbuf, wl, wr, br):
    Bc = B // num_chunks
    H = wl.shape[0]
    H2 = 2 * H

    grid_spec = pltpu.PrefetchScalarGridSpec(
        num_scalar_prefetch=6,
        grid=(num_chunks,),
        in_specs=[
            pl.BlockSpec((None, Bc * T, H2), lambda c, *_: (c, 0, 0)),  # buffers
            pl.BlockSpec((H, 5 * H), lambda c, *_: (0, 0)),             # W left
            pl.BlockSpec((H, 5 * H), lambda c, *_: (0, 0)),             # W right
            pl.BlockSpec((1, 5 * H), lambda c, *_: (0, 0)),             # bias
        ],
        out_specs=pl.BlockSpec((None, Bc, H), lambda c, *_: (c, 0, 0)),
        scratch_shapes=[
            pltpu.VMEM((Bc * (T + 1), H2), jnp.float32),  # stack (h||c) + dump rows
            pltpu.VMEM((Bc, H2), jnp.float32),            # left children
            pltpu.VMEM((Bc, H2), jnp.float32),            # right children
            pltpu.VMEM((Bc, H2), jnp.float32),            # reduce-cell output
        ],
    )
    # Explicit VMEM budget (review item): computed footprint + headroom.
    footprint = 4 * (2 * (Bc * T * H2 + 2 * H * 5 * H + 5 * H + Bc * H)
                     + Bc * (T + 4) * H2)
    vmem_limit = int(min(100 * 2**20, max(32 * 2**20, 2 * footprint)))
    return pl.pallas_call(
        partial(_tree_kernel, B, Bc, T, H),
        grid_spec=grid_spec,
        out_shape=jax.ShapeDtypeStruct((num_chunks, Bc, H), jnp.float32),
        compiler_params=pltpu.CompilerParams(
            dimension_semantics=("parallel",),
            vmem_limit_bytes=vmem_limit),
    )(op, src, lpos, rpos, dst, anyred, hcbuf, wl, wr, br)


# ---------------------------------------------------------------------------
# Host-side schedule precomputation: simulate only the stack / buffer POINTERS
# (no data) and emit flat int32 arrays for scalar prefetch.
# ---------------------------------------------------------------------------
def build_schedule(transitions, T):
    trans = np.asarray(transitions)
    S, B = trans.shape
    op = np.full((S, B), NOOP, np.int32)
    src = np.zeros((S, B), np.int32)
    lpos = np.zeros((S, B), np.int32)
    rpos = np.zeros((S, B), np.int32)
    dst = np.full((S, B), T, np.int32)           # default: per-batch dump row
    anyred = np.zeros((S,), np.int32)
    buf_top = np.full((B,), T - 1, np.int32)     # buffers are popped from the end
    sp = np.zeros((B,), np.int32)                # stack sizes
    for t in range(S):
        for b in range(B):
            tr = int(trans[t, b])
            if tr == SHIFT:
                op[t, b] = SHIFT
                src[t, b] = buf_top[b]
                dst[t, b] = sp[b]
                buf_top[b] -= 1
                sp[b] += 1
            elif tr == REDUCE:
                assert sp[b] >= 2, "Stack too small!"
                op[t, b] = REDUCE
                lpos[t, b] = sp[b] - 2
                rpos[t, b] = sp[b] - 1
                dst[t, b] = sp[b] - 2
                sp[b] -= 1
                anyred[t] = 1

    def flat(a):
        return jnp.asarray(a.reshape(-1), dtype=jnp.int32)

    return (flat(op), flat(src), flat(lpos), flat(rpos), flat(dst),
            jnp.asarray(anyred, dtype=jnp.int32))


# ---------------------------------------------------------------------------
# TreeLSTM module (parameters + driver)
# ---------------------------------------------------------------------------
class TreeLSTMPallas:
    """Pallas port of the PyTorch TreeLSTM forward (use_cae=False path).

    For lane-dense stores / gate slices, hidden_size should be a multiple of
    128 (the demo uses H=128)."""

    def __init__(self, input_size, hidden_size, key):
        self.input_size = input_size
        self.hidden_size = hidden_size
        E, H = input_size, hidden_size
        ks = jax.random.split(key, 6)

        def uni(k, shape, stdv):
            return jax.random.uniform(k, shape, jnp.float32, -stdv, stdv)

        stdv_x = 1.0 / math.sqrt(E)
        stdv_h = 1.0 / math.sqrt(H)
        # stored pre-transposed: y = x @ W + b
        self.wx = uni(ks[0], (E, H), stdv_x)          # proj_x
        self.bx = uni(ks[1], (1, H), stdv_x)
        self.wg = uni(ks[2], (E, H), stdv_x)          # proj_x_gate
        self.bg = uni(ks[3], (1, H), stdv_x)
        # fused buffer-projection weight: proj = x @ [Wx || Wg] + [bx || bg]
        self.w_proj = jnp.concatenate([self.wx, self.wg], axis=1)   # [E, 2H]
        self.b_proj = jnp.concatenate([self.bx, self.bg], axis=1)   # [1, 2H]
        # canonical reduce weights: proj = [h_l || h_r] @ w_red + b_red
        self.w_red = uni(ks[4], (2 * H, 5 * H), stdv_h)
        self.b_red = uni(ks[5], (1, 5 * H), stdv_h)
        # kernel layout: left / right halves as two [H, 5H] matrices (2 matmuls)
        self.wl = self.w_red[:H]
        self.wr = self.w_red[H:]
        self.br = self.b_red
        # TODO(synk): dropout layers (p=0.25 / p=0.5) exist in the PyTorch
        # module but are never applied in its forward, so they are omitted.

    def __call__(self, x, transitions):
        """x: [B, T, E] (assumed reversed, like the PyTorch module);
        transitions: [2T-1, B] with 0=SHIFT, 1=REDUCE.  Returns [B, H]."""
        B, T, E = x.shape
        H = self.hidden_size
        hc = buffers_forward(x.reshape(B * T, E), self.w_proj, self.b_proj)
        # Split the batch over chunks so v7x's two TensorCores each take half
        # (a short sequential loop on single-TC v5e / v6e).
        num_chunks = 2 if (B % 2 == 0 and B >= 2) else 1
        Bc = B // num_chunks
        hcbuf = hc.reshape(num_chunks, Bc * T, 2 * H)
        op, src, lpos, rpos, dst, anyred = build_schedule(transitions, T)
        out = _tree_forward_impl(B, num_chunks, T, op, src, lpos, rpos, dst,
                                 anyred, hcbuf, self.wl, self.wr, self.br)
        return out.reshape(B, H)

    # Pure-JAX reference (no Pallas) for correctness checking.
    def reference(self, x, transitions):
        B, T, _ = x.shape
        c_buf = x @ self.wx + self.bx[0]
        h_buf = jax.nn.sigmoid(x @ self.wg + self.bg[0]) * jnp.tanh(c_buf)
        buffer_lists = [
            [(h_buf[b, t], c_buf[b, t]) for t in range(T)] for b in range(B)
        ]
        stacks = [[] for _ in range(B)]
        for t_batch in np.asarray(transitions):
            child_l, child_r, reduce_idx = [], [], []
            for b, transition in enumerate(t_batch):
                if transition == SHIFT:
                    stacks[b].append(buffer_lists[b].pop())
                elif transition == REDUCE:
                    child_r.append(stacks[b].pop())
                    child_l.append(stacks[b].pop())
                    reduce_idx.append(b)
            if child_l:
                h_l = jnp.stack([h for (h, _) in child_l])
                c_l = jnp.stack([c for (_, c) in child_l])
                h_r = jnp.stack([h for (h, _) in child_r])
                c_r = jnp.stack([c for (_, c) in child_r])
                children = jnp.concatenate([h_l, h_r], axis=-1)
                proj = children @ self.w_red + self.b_red
                i, f_l, f_r, g, o = jnp.split(proj, 5, axis=-1)
                c = (jax.nn.sigmoid(f_l) * c_l + jax.nn.sigmoid(f_r) * c_r
                     + jax.nn.sigmoid(i) * jnp.tanh(g))
                h = jax.nn.sigmoid(o) * jnp.tanh(c)
                for j, b in enumerate(reduce_idx):
                    stacks[b].append((h[j], c[j]))
        return jnp.stack([stack.pop()[0] for stack in stacks], axis=0)


def make_transitions(B, T):
    """Valid shift/reduce sequences of length 2T-1 per batch element."""
    seqs = []
    # batch 0: left-branching  S S R (S R)*(T-2)
    s = [SHIFT, SHIFT, REDUCE]
    for _ in range(T - 2):
        s += [SHIFT, REDUCE]
    seqs.append(s)
    # remaining batches: all shifts then all reduces
    for _ in range(B - 1):
        seqs.append([SHIFT] * T + [REDUCE] * (T - 1))
    return np.asarray(seqs, dtype=np.int32).T     # [2T-1, B]


if __name__ == "__main__":
    # H = 128 so gate slices / stack rows / output stores are lane-dense
    # (per perf review: H should be a multiple of 128).
    B, T, E, H = 2, 8, 16, 128
    key = jax.random.PRNGKey(0)
    k_param, k_x = jax.random.split(key)

    model = TreeLSTMPallas(E, H, k_param)
    x = jax.random.normal(k_x, (B, T, E), dtype=jnp.float32)
    transitions = make_transitions(B, T)          # [2T-1, B]

    out = jax.block_until_ready(model(x, transitions))   # [B, H]
    assert out.shape == (B, H), out.shape

    ref = jax.block_until_ready(model.reference(x, transitions))
    # Tolerance tightened 25x vs v1 (was atol=5e-2). Kept at 2e-3 (not 1e-5)
    # only because the XLA reference and Mosaic MXU may use different default
    # f32 matmul precisions; 2e-3 still catches any indexing/scatter bug,
    # which would produce O(0.1-1) errors.
    np.testing.assert_allclose(np.asarray(out), np.asarray(ref),
                               rtol=2e-3, atol=2e-3)
    print("KERNEL_OK")
</pallas_src>

<mosaic_0001>
module attributes {stable_mosaic.version = 11 : i64} {
  func.func @_buffers_kernel(%arg0: i32, %arg1: memref<16x16xf32, #tpu.memory_space<vmem>>, %arg2: memref<16x256xf32, #tpu.memory_space<vmem>>, %arg3: memref<1x256xf32, #tpu.memory_space<vmem>>, %arg4: memref<16x256xf32, #tpu.memory_space<vmem>>) attributes {dimension_semantics = [#tpu.dimension_semantics<parallel>], iteration_bounds = array<i64: 1>, scalar_prefetch = 0 : i64, scratch_operands = 0 : i64, tpu.core_type = #tpu.core_type<tc>, window_params = [{transform_indices = @transform_0, window_bounds = array<i64: 16, 16>}, {pipeline_mode = #tpu.pipeline_mode<synchronous>, transform_indices = @transform_1, window_bounds = array<i64: 16, 256>}, {pipeline_mode = #tpu.pipeline_mode<synchronous>, transform_indices = @transform_2, window_bounds = array<i64: 1, 256>}, {transform_indices = @transform_3, window_bounds = array<i64: 16, 256>}]} {
    %c0 = arith.constant 0 : index
    %c0_0 = arith.constant 0 : index
    %0 = vector.load %arg1[%c0, %c0_0] : memref<16x16xf32, #tpu.memory_space<vmem>>, vector<16x16xf32>
    %c0_1 = arith.constant 0 : index
    %c0_2 = arith.constant 0 : index
    %1 = vector.load %arg2[%c0_1, %c0_2] : memref<16x256xf32, #tpu.memory_space<vmem>>, vector<16x256xf32>
    %cst = arith.constant dense<0.000000e+00> : vector<16x256xf32>
    %2 = tpu.matmul %0, %1, %cst {dimension_numbers = #tpu.dot_dimension_numbers<[1], [0], [0], [1], [0, 0, 1, 1], [], []>} : vector<16x16xf32>, vector<16x256xf32>, vector<16x256xf32> -> vector<16x256xf32>
    %c0_3 = arith.constant 0 : index
    %c0_4 = arith.constant 0 : index
    %3 = vector.load %arg3[%c0_3, %c0_4] : memref<1x256xf32, #tpu.memory_space<vmem>>, vector<1x256xf32>
    %4 = vector.broadcast %3 : vector<1x256xf32> to vector<16x256xf32>
    %5 = arith.addf %2, %4 : vector<16x256xf32>
    %6 = vector.extract_strided_slice %5 {offsets = [0, 0], sizes = [16, 128], strides = [1, 1]} : vector<16x256xf32> to vector<16x128xf32>
    %7 = vector.extract_strided_slice %5 {offsets = [0, 128], sizes = [16, 128], strides = [1, 1]} : vector<16x256xf32> to vector<16x128xf32>
    %8 = arith.negf %7 : vector<16x128xf32>
    %9 = math.exp %8 : vector<16x128xf32>
    %cst_5 = arith.constant 1.000000e+00 : f32
    %10 = vector.broadcast %cst_5 : f32 to vector<16x128xf32>
    %11 = arith.addf %10, %9 : vector<16x128xf32>
    %12 = arith.divf %10, %11 : vector<16x128xf32>
    %13 = math.tanh %6 : vector<16x128xf32>
    %14 = arith.mulf %12, %13 : vector<16x128xf32>
    %15 = tpu.concatenate %14, %6 in 1 : vector<16x128xf32>, vector<16x128xf32> -> vector<16x256xf32>
    %c0_6 = arith.constant 0 : index
    %c0_7 = arith.constant 0 : index
    %16 = vector.load %arg4[%c0_6, %c0_7] : memref<16x256xf32, #tpu.memory_space<vmem>>, vector<16x256xf32>
    tpu.vector_store %arg4[%c0_6, %c0_7], %15 {strides = array<i32>} : memref<16x256xf32, #tpu.memory_space<vmem>>, vector<16x256xf32>,
    return
  }
  func.func @transform_0(%arg0: i32) -> (i32, i32) {
    %c0_i32 = arith.constant 0 : i32
    %c0_i32_0 = arith.constant 0 : i32
    return %arg0, %c0_i32 : i32, i32
  }
  func.func @transform_1(%arg0: i32) -> (i32, i32) {
    %c0_i32 = arith.constant 0 : i32
    %c0_i32_0 = arith.constant 0 : i32
    %c0_i32_1 = arith.constant 0 : i32
    return %c0_i32, %c0_i32_0 : i32, i32
  }
  func.func @transform_2(%arg0: i32) -> (i32, i32) {
    %c0_i32 = arith.constant 0 : i32
    %c0_i32_0 = arith.constant 0 : i32
    %c0_i32_1 = arith.constant 0 : i32
    return %c0_i32, %c0_i32_0 : i32, i32
  }
  func.func @transform_3(%arg0: i32) -> (i32, i32) {
    %c0_i32 = arith.constant 0 : i32
    %c0_i32_0 = arith.constant 0 : i32
    return %arg0, %c0_i32 : i32, i32
  }
}

</mosaic_0001>

<llo_original>
// kernel: buffers_forward.1
$region0: #{buffers_forward.1}
  #allocation0 [shape = 'u32[]', space=smem, size = 0x4, offset = 0x4, fixed_abs, tag = 'smem constant byte address 0x4 - core index']
  #allocation1 [shape = 'u32[144,128]{1,0:T(1,128)}', space=vmem, size = 0x12000, scoped, tag = 'internal scratch']
  %s0 = inlined_call_operand.hbm [shape: f32[16,16], index: 0, kind: input, shape index: {}]
  %s1 = inlined_call_operand.hbm [shape: f32[16,256], index: 1, kind: input, shape index: {}]
  %s2 = inlined_call_operand.vmem [shape: f32[1,256], index: 2, kind: input, shape index: {}]
  %s3 = inlined_call_operand.hbm [shape: f32[16,256], index: 3, kind: output, shape index: {}]
  %s4 = sld [smem:[#allocation0]]
  $region30: #{buffers_forward.1} parent=0
    _
  %s6 = ssub.s32 1, %s4
  %s7 = scalar_select 0, %s6, %s4
  $region1: #{buffers_forward.1} parent=0
    #allocation2 [shape = 'u8[8192]{0}', space=vmem, size = 0x2000, scoped, tag = 'input window, operand 0, single buffered']
    #allocation3 [shape = 's32[1]{0}', space=sflag, size = 0x4, scoped, tag = 'scoped memory for buffers_forward.1']
    #allocation4 [shape = 's32[1]{0}', space=sflag, size = 0x4, scoped, tag = 'scoped memory for buffers_forward.1']
    #allocation5 [shape = 'u8[16384]{0}', space=vmem, size = 0x4000, scoped, tag = 'input window, operand 1, single buffered']
    #allocation6 [shape = 's32[1]{0}', space=sflag, size = 0x4, scoped, tag = 'scoped memory for buffers_forward.1']
    #allocation7 [shape = 'u8[16384]{0}', space=vmem, size = 0x4000, scoped, tag = 'output window, operand 0, single buffered']
    %8 = vsyncpa [#allocation3], 0
    %9 = vsyncpa [#allocation6], 0
    %10 = vsyncpa [#allocation4], 0
    // Predicated region
    $region2: #{buffers_forward.1} parent=1 // pred_check
      _
    $region3: #{buffers_forward.1} parent=1 // pred_check_branch
      %12 = sbr.rel (0) target = $region5
    $region4: #{buffers_forward.1} parent=1 // pred_region
      %s14 = ssub.s32 256, 256
      %15 = vsyncadd [#allocation3], %s14
      %s16 = sshll.u32 [#allocation2], 4
      %s17 = int_to_ptr.vmem [resolvable:$true] %s16
      %22 = dma.hbm_to_vmem [thread:$0]  %s0, 256, %s17, [#allocation3], 128, 128, 8
    $region5: #{buffers_forward.1} parent=1 // pred_fallthru
      _
    // Predicated region
    $region6: #{buffers_forward.1} parent=1 // pred_check
      _
    $region7: #{buffers_forward.1} parent=1 // pred_check_branch
      %24 = sbr.rel (0) target = $region9
    $region8: #{buffers_forward.1} parent=1 // pred_region
      %s26 = ssub.s32 512, 512
      %27 = vsyncadd [#allocation6], %s26
      %s28 = sshll.u32 [#allocation5], 4
      %s29 = int_to_ptr.vmem [resolvable:$true] %s28
      %34 = dma.hbm_to_vmem [thread:$0]  %s1, 512, %s29, [#allocation6], 256, 256, 16
    $region9: #{buffers_forward.1} parent=1 // pred_fallthru
      _
    // Predicated region
    $region10: #{buffers_forward.1} parent=1 // pred_check
      _
    $region11: #{buffers_forward.1} parent=1 // pred_check_branch
      %36 = sbr.rel (0) target = $region13
    $region12: #{buffers_forward.1} parent=1 // pred_region
      _
    $region13: #{buffers_forward.1} parent=1 // pred_fallthru
      _
    // Predicated region
    $region14: #{buffers_forward.1} parent=1 // pred_check
      _
    $region15: #{buffers_forward.1} parent=1 // pred_check_branch
      %38 = sbr.rel (0) target = $region17
    $region16: #{buffers_forward.1} parent=1 // pred_region
      %39 = dma.done [#allocation3], 256
    $region17: #{buffers_forward.1} parent=1 // pred_fallthru
      _
    // Predicated region
    $region18: #{buffers_forward.1} parent=1 // pred_check
      _
    $region19: #{buffers_forward.1} parent=1 // pred_check_branch
      %41 = sbr.rel (0) target = $region21
    $region20: #{buffers_forward.1} parent=1 // pred_region
      %42 = dma.done [#allocation6], 512
    $region21: #{buffers_forward.1} parent=1 // pred_fallthru
      _
    %v43 = vld [vmem:[#allocation2] sm:$0xff]
    %v44 = vld [vmem:[#allocation2 + $0x8] sm:$0xff]
    %v45 = vld [vmem:[#allocation5] sm:$0xff]
    %v46 = vld [vmem:[#allocation5 + $0x8] sm:$0xff]
    %v47 = vld [vmem:[#allocation5 + $0x10] sm:$0xff]
    %v48 = vld [vmem:[#allocation5 + $0x18] sm:$0xff]
    %v49 = vld [vmem:[%s2] sm:$0x3]
    %v51 = vlaneseq
    %v52 = vshrl.u32 %v51, 7
    %v53 = vsub.s32 0, %v52
    %v54 = vrot.slane %v49, %v53
    %v55 = vlaneseq
    %v56 = vshrl.u32 %v55, 7
    %v57 = vsub.s32 1, %v56
    %v58 = vrot.slane %v49, %v57
    %vm61 = vcmask 130048
    %v63 = vsel %vm61, %v43, 0
    %v66 = vsel %vm61, %v44, 0
    %68 = vmatprep.subr.mxu0 0.0
    %69 = vmatpush1.msra.mxu0 0.0
    %70 = vmatprep.subr.mxu0 0.0
    %71 = vmatpush1.msra.mxu0 0.0
    %72 = vmatprep.subr.mxu0 0.0
    %73 = vmatpush1.msra.mxu0 0.0
    %74 = vmatprep.subr.mxu0 0.0
    %75 = vmatpush1.msra.mxu0 0.0
    %76 = vmatprep.subr.mxu0 0.0
    %77 = vmatpush1.msra.mxu0 0.0
    %78 = vmatprep.subr.mxu0 0.0
    %79 = vmatpush1.msra.mxu0 0.0
    %80 = vmatprep.subr.mxu0 0.0
    %81 = vmatpush1.msra.mxu0 0.0
    %82 = vmatprep.subr.mxu0 0.0
    %83 = vmatpush1.msra.mxu0 0.0
    %84 = vmatprep.subr.mxu0 0.0
    %85 = vmatpush1.msra.mxu0 0.0
    %86 = vmatprep.subr.mxu0 0.0
    %87 = vmatpush1.msra.mxu0 0.0
    %88 = vmatprep.subr.mxu0 0.0
    %89 = vmatpush1.msra.mxu0 0.0
    %90 = vmatprep.subr.mxu0 0.0
    %91 = vmatpush1.msra.mxu0 0.0
    %92 = vmatprep.subr.mxu0 0.0
    %93 = vmatpush1.msra.mxu0 0.0
    %94 = vmatprep.subr.mxu0 0.0
    %95 = vmatpush1.msra.mxu0 0.0
    %96 = vmatprep.subr.mxu0 %v48
    %97 = vmatpush1.msra.mxu0 %v47
    %98 = vmatprep.subr.mxu0 %v46
    %99 = vmatpush1.msra.mxu0 %v45
    %100 = vmatprep.subr.mxu0 0.0
    %101 = vmatpush2.msra.mxu0 0.0
    %102 = vmatprep.subr.mxu0 0.0
    %103 = vmatpush2.msra.mxu0 0.0
    %104 = vmatprep.subr.mxu0 0.0
    %105 = vmatpush2.msra.mxu0 0.0
    %106 = vmatprep.subr.mxu0 0.0
    %107 = vmatpush2.msra.mxu0 0.0
    %108 = vmatprep.subr.mxu0 0.0
    %109 = vmatpush2.msra.mxu0 0.0
    %110 = vmatprep.subr.mxu0 0.0
    %111 = vmatpush2.msra.mxu0 0.0
    %112 = vmatprep.subr.mxu0 0.0
    %113 = vmatpush2.msra.mxu0 0.0
    %114 = vmatprep.subr.mxu0 0.0
    %115 = vmatpush2.msra.mxu0 0.0
    %116 = vmatprep.subr.mxu0 0.0
    %117 = vmatpush2.msra.mxu0 0.0
    %118 = vmatprep.subr.mxu0 0.0
    %119 = vmatpush2.msra.mxu0 0.0
    %120 = vmatprep.subr.mxu0 0.0
    %121 = vmatpush2.msra.mxu0 0.0
    %122 = vmatprep.subr.mxu0 0.0
    %123 = vmatpush2.msra.mxu0 0.0
    %124 = vmatprep.subr.mxu0 0.0
    %125 = vmatpush2.msra.mxu0 0.0
    %126 = vmatprep.subr.mxu0 0.0
    %127 = vmatpush2.msra.mxu0 0.0
    %128 = vmatprep.subr.mxu0 0.0
    %129 = vmatpush2.msra.mxu0 0.0
    %130 = vmatprep.subr.mxu0 0.0
    %131 = vmatpush2.msra.mxu0 0.0
    %132 = vmatprep.mubr.f32.mxu0 0.0
    %133 = vmatmul.mubr.f32.gmra.mxu0 %v63
    %v134 = vpop.f32.mrf.mxu0
    %v135 = vadd.f32 %v54, %v134
    %v136 = vpop.f32.mrf.mxu0
    %v137 = vadd.f32 %v58, %v136
    %138 = vmatprep.mubr.f32.mxu0 0.0
    %139 = vmatmul.mubr.f32.gmra.mxu0 %v66
    %v140 = vpop.f32.mrf.mxu0
    %v141 = vadd.f32 %v54, %v140
    %v142 = vpop.f32.mrf.mxu0
    %v143 = vadd.f32 %v58, %v142
    %144 = vdwg.mxu0
    %v145 = vxor.u32 %v137, 2147483648
    %v146 = vxor.u32 %v143, 2147483648
    %v147 = vmul.f32 %v145, 1.442695
    %v148 = vpow.pop %v147
    %v149 = vmul.f32 %v146, 1.442695
    %v150 = vpow.pop %v149
    %v151 = vadd.f32 %v148, 1.0
    %v152 = vadd.f32 %v150, 1.0
    %v153 = vrcp.pop %v151
    %v154 = vmul.f32 1.0, %v153
    %v155 = vrcp.pop %v152
    %v156 = vmul.f32 1.0, %v155
    %v157 = vtanh.pop %v135
    %v158 = vtanh.pop %v141
    %v159 = vmul.f32 %v154, %v157
    %v160 = vmul.f32 %v156, %v158
    %161 = vst [vmem:[#allocation7] sm:$0xff] %v159
    %162 = vst [vmem:[#allocation7 + $0x8] sm:$0xff] %v135
    %163 = vst [vmem:[#allocation7 + $0x10] sm:$0xff] %v160
    %164 = vst [vmem:[#allocation7 + $0x18] sm:$0xff] %v141
    // Predicated region
    $region22: #{buffers_forward.1} parent=1 // pred_check
      _
    $region23: #{buffers_forward.1} parent=1 // pred_check_branch
      %166 = sbr.rel (0) target = $region25
    $region24: #{buffers_forward.1} parent=1 // pred_region
      %s168 = ssub.s32 512, 512
      %169 = vsyncadd [#allocation4], %s168
      %s170 = sshll.u32 [#allocation7], 4
      %s171 = int_to_ptr.vmem [resolvable:$true] %s170
      %176 = dma.vmem_to_hbm [thread:$0]  %s171, 512, %s3, [#allocation4], 256, 256, 16
    $region25: #{buffers_forward.1} parent=1 // pred_fallthru
      _
    // Predicated region
    $region26: #{buffers_forward.1} parent=1 // pred_check
      _
    $region27: #{buffers_forward.1} parent=1 // pred_check_branch
      %178 = sbr.rel (0) target = $region29
    $region28: #{buffers_forward.1} parent=1 // pred_region
      %179 = dma.done [#allocation4], 512
    $region29: #{buffers_forward.1} parent=1 // pred_fallthru
      _
    %180 = vsyncpa [#allocation3], 1
    %181 = vsyncpa [#allocation6], 1
    %182 = vsyncpa [#allocation4], 1

</llo_original>
